<compile_context>
chip_gen: v5e
topology: v5e:2x2
jax: 0.10.0
libtpu: 0.0.40
codegen_flags: <defaults>
</compile_context>

<pallas_src>
import jax
import jax.numpy as jnp
from jax.experimental import pallas as pl
from jax.experimental.pallas import tpu as pltpu

HIDDEN = 32

# Column layout of the single packed constant tile, shape (HIDDEN, 128):
#   [ 0:32)   conv1 W^T
#   [32:64)   conv2 W^T
#   [64:96)   conv3 W^T
#   [96:98)   fc1 W^T (two columns, one per input feature)
#   [98]      fc1 bias
#   [99:102)  conv1/2/3 biases
#   [102]     fc3 weight
#   [103]     fc3 bias (broadcast down the column; kernel reads row 0)
_W1_COL = 96
_B1_COL = 98
_BC_COL = 99
_W3_COL = 102
_B3_COL = 103


# ---------------------------------------------------------------------------
# Pallas kernel: full forward pass, transposed activation layout (hidden, N).
# ---------------------------------------------------------------------------
def gcn_net_kernel(xT_ref, aT_ref, cst_ref, out_ref):
    """xT: (2, N)   aT: (N, N) = A_hat^T   cst: (H, 128) packed constants
    out: (1, N) lane-dense output row."""
    xT = xT_ref[...]        # (2, N)
    aT = aT_ref[...]        # (N, N)
    cst = cst_ref[...]      # (H, 128) — loaded once, sliced as values below

    # fc1 + relu on the VPU (a K=2 matmul is not worth an MXU round trip):
    #   H = W1^T x^T + b1  ==  w1col0 * x_row0 + w1col1 * x_row1 + b1_col
    h = (cst[:, _W1_COL:_W1_COL + 1] * xT[0:1, :]
         + cst[:, _W1_COL + 1:_W1_COL + 2] * xT[1:2, :]
         + cst[:, _B1_COL:_B1_COL + 1])
    h = jnp.maximum(h, 0.0)                                              # (H, N)

    # three GCNConv layers, transposed:  H <- relu(Wc^T (H A_hat^T) + bc)
    # (identical math to  relu(A_hat (h Wc) + bc)  in the untransposed layout)
    for l in range(3):
        ha = jnp.dot(h, aT, preferred_element_type=jnp.float32)          # (H, N)
        wT = cst[:, l * HIDDEN:(l + 1) * HIDDEN]                         # (H, H)
        h = jnp.dot(wT, ha, preferred_element_type=jnp.float32)          # (H, N)
        h = jnp.maximum(h + cst[:, _BC_COL + l:_BC_COL + l + 1], 0.0)

    # fc3 on VPU + XLU (a single-output-column matmul would waste the MXU):
    #   out[n] = sum_f h[f, n] * w3[f] + b3   -> lane-dense (1, N) row.
    out = (jnp.sum(h * cst[:, _W3_COL:_W3_COL + 1], axis=0, keepdims=True)
           + cst[0:1, _B3_COL:_B3_COL + 1])
    out_ref[...] = out.astype(out_ref.dtype)


# ---------------------------------------------------------------------------
# Plain-JAX glue (run once, outside the per-forward path).
# ---------------------------------------------------------------------------
def build_normalized_adjacency_T(edge_index, num_nodes):
    """Return A_hat^T with A_hat = D^{-1/2} (A + I) D^{-1/2} (PyG convention,
    messages flow src -> dst).  Duplicate edges accumulate; the diagonal is
    forced to exactly 1 (see semantics note at top of file).  The transpose is
    done here, once, so the per-call path never pays for a relayout."""
    src, dst = edge_index[0], edge_index[1]
    a = jnp.zeros((num_nodes, num_nodes), jnp.float32)
    a = a.at[dst, src].add(1.0)                       # messages flow src -> dst
    eye = jnp.eye(num_nodes, dtype=jnp.float32)
    a = a * (1.0 - eye) + eye                         # exactly one self loop
    deg = a.sum(axis=1)
    dinv = jnp.where(deg > 0, 1.0 / jnp.sqrt(deg), 0.0)
    a_hat = dinv[:, None] * a * dinv[None, :]
    return a_hat, a_hat.T


def init_params(key, hidden=HIDDEN):
    ks = jax.random.split(key, 10)

    def lin(kw, kb, fan_in, fan_out):
        bound = 1.0 / jnp.sqrt(jnp.float32(fan_in))
        w = jax.random.uniform(kw, (fan_in, fan_out), jnp.float32, -bound, bound)
        b = jax.random.uniform(kb, (1, fan_out), jnp.float32, -bound, bound)
        return w, b

    w1, b1 = lin(ks[0], ks[1], 2, hidden)          # fc1
    wc1, bc1 = lin(ks[2], ks[3], hidden, hidden)   # conv1
    wc2, bc2 = lin(ks[4], ks[5], hidden, hidden)   # conv2
    wc3, bc3 = lin(ks[6], ks[7], hidden, hidden)   # conv3
    w3, b3 = lin(ks[8], ks[9], hidden, 1)          # fc3
    return (w1, b1, wc1, bc1, wc2, bc2, wc3, bc3, w3, b3)


def pack_params(params, hidden=HIDDEN):
    """Pack all 10 parameter arrays into ONE lane-dense (hidden, 128) tile."""
    w1, b1, wc1, bc1, wc2, bc2, wc3, bc3, w3, b3 = params
    cst = jnp.zeros((hidden, 128), jnp.float32)
    cst = cst.at[:, 0:hidden].set(wc1.T)                  # conv weights (transposed)
    cst = cst.at[:, hidden:2 * hidden].set(wc2.T)
    cst = cst.at[:, 2 * hidden:3 * hidden].set(wc3.T)
    cst = cst.at[:, _W1_COL:_W1_COL + 2].set(w1.T)        # fc1 weight (H, 2)
    cst = cst.at[:, _B1_COL].set(b1[0])                   # fc1 bias
    cst = cst.at[:, _BC_COL].set(bc1[0])                  # conv biases
    cst = cst.at[:, _BC_COL + 1].set(bc2[0])
    cst = cst.at[:, _BC_COL + 2].set(bc3[0])
    cst = cst.at[:, _W3_COL].set(w3[:, 0])                # fc3 weight
    cst = cst.at[:, _B3_COL].set(b3[0, 0])                # fc3 bias (bcast column)
    return cst


@jax.jit
def net_forward_row(x, a_hat_T, cst):
    """x: (N, 2), a_hat_T: precomputed A_hat^T, cst: packed (H, 128).

    Returns the lane-dense (1, N) output row.  Callers needing the module's
    (N, 1) shape should reshape OUTSIDE this latency-bound path."""
    n = x.shape[0]
    xT = x.T    # tiny (2, N) transpose; the operand pads to one (8,128) tile
    return pl.pallas_call(
        gcn_net_kernel,
        out_shape=jax.ShapeDtypeStruct((1, n), jnp.float32),
        # no grid: every operand is one full-array VMEM block (3 input DMAs)
        in_specs=[pl.BlockSpec(memory_space=pltpu.MemorySpace.VMEM)] * 3,
        out_specs=pl.BlockSpec(memory_space=pltpu.MemorySpace.VMEM),
    )(xT, a_hat_T, cst)


def reference_forward(x, a_hat, params):
    """Pure-JAX reference (untransposed), for the correctness check."""
    w1, b1, wc1, bc1, wc2, bc2, wc3, bc3, w3, b3 = params
    h = jax.nn.relu(x @ w1 + b1)
    for wc, bc in ((wc1, bc1), (wc2, bc2), (wc3, bc3)):
        h = jax.nn.relu(a_hat @ (h @ wc) + bc)
    return h @ w3 + b3


if __name__ == "__main__":
    key = jax.random.PRNGKey(0)
    k_x, k_p = jax.random.split(key)

    N = 64  # number of graph nodes
    # node features: (N, 2) as implied by fc1 = Linear(2, 32)
    x = jax.random.normal(k_x, (N, 2), jnp.float32)

    # synthetic ring graph, both directions -> edge_index shape (2, 2N)
    idx = jnp.arange(N)
    nxt = (idx + 1) % N
    edge_index = jnp.stack(
        [jnp.concatenate([idx, nxt]), jnp.concatenate([nxt, idx])], axis=0
    ).astype(jnp.int32)

    params = init_params(k_p, hidden=HIDDEN)

    # Hoisted one-time prep: normalized adjacency (+ its transpose) and the
    # single packed constant tile.
    a_hat, a_hat_T = jax.block_until_ready(
        build_normalized_adjacency_T(edge_index, N))
    cst = jax.block_until_ready(pack_params(params))

    out_row = net_forward_row(x, a_hat_T, cst)      # (1, N) lane-dense row
    jax.block_until_ready(out_row)
    assert out_row.shape == (1, N)

    # Module-shaped view (outside the hot path) and correctness check.
    out = out_row.reshape(N, 1)
    ref = reference_forward(x, a_hat, params)
    err = float(jnp.max(jnp.abs(out - ref)))
    assert err < 1e-4, f"mismatch vs reference: max abs err {err}"

    print("KERNEL_OK")
</pallas_src>

<mosaic_0001>
module attributes {stable_mosaic.version = 11 : i64} {
  func.func @gcn_net_kernel(%arg0: memref<2x64xf32, #tpu.memory_space<vmem>>, %arg1: memref<64x64xf32, #tpu.memory_space<vmem>>, %arg2: memref<32x128xf32, #tpu.memory_space<vmem>>, %arg3: memref<1x64xf32, #tpu.memory_space<vmem>>) attributes {dimension_semantics = [], scalar_prefetch = 0 : i64, scratch_operands = 0 : i64, tpu.core_type = #tpu.core_type<tc>} {
    %c0 = arith.constant 0 : index
    %c0_0 = arith.constant 0 : index
    %0 = vector.load %arg0[%c0, %c0_0] : memref<2x64xf32, #tpu.memory_space<vmem>>, vector<2x64xf32>
    %c0_1 = arith.constant 0 : index
    %c0_2 = arith.constant 0 : index
    %1 = vector.load %arg1[%c0_1, %c0_2] : memref<64x64xf32, #tpu.memory_space<vmem>>, vector<64x64xf32>
    %c0_3 = arith.constant 0 : index
    %c0_4 = arith.constant 0 : index
    %2 = vector.load %arg2[%c0_3, %c0_4] : memref<32x128xf32, #tpu.memory_space<vmem>>, vector<32x128xf32>
    %3 = vector.extract_strided_slice %2 {offsets = [0, 96], sizes = [32, 1], strides = [1, 1]} : vector<32x128xf32> to vector<32x1xf32>
    %4 = vector.extract_strided_slice %0 {offsets = [0, 0], sizes = [1, 64], strides = [1, 1]} : vector<2x64xf32> to vector<1x64xf32>
    %5 = vector.broadcast %3 : vector<32x1xf32> to vector<32x64xf32>
    %6 = vector.broadcast %4 : vector<1x64xf32> to vector<32x64xf32>
    %7 = arith.mulf %5, %6 : vector<32x64xf32>
    %8 = vector.extract_strided_slice %2 {offsets = [0, 97], sizes = [32, 1], strides = [1, 1]} : vector<32x128xf32> to vector<32x1xf32>
    %9 = vector.extract_strided_slice %0 {offsets = [1, 0], sizes = [1, 64], strides = [1, 1]} : vector<2x64xf32> to vector<1x64xf32>
    %10 = vector.broadcast %8 : vector<32x1xf32> to vector<32x64xf32>
    %11 = vector.broadcast %9 : vector<1x64xf32> to vector<32x64xf32>
    %12 = arith.mulf %10, %11 : vector<32x64xf32>
    %13 = arith.addf %7, %12 : vector<32x64xf32>
    %14 = vector.extract_strided_slice %2 {offsets = [0, 98], sizes = [32, 1], strides = [1, 1]} : vector<32x128xf32> to vector<32x1xf32>
    %15 = vector.broadcast %14 : vector<32x1xf32> to vector<32x64xf32>
    %16 = arith.addf %13, %15 : vector<32x64xf32>
    %cst = arith.constant 0.000000e+00 : f32
    %17 = vector.broadcast %cst : f32 to vector<32x64xf32>
    %18 = arith.maximumf %16, %17 : vector<32x64xf32>
    %cst_5 = arith.constant dense<0.000000e+00> : vector<32x64xf32>
    %19 = tpu.matmul %18, %1, %cst_5 {dimension_numbers = #tpu.dot_dimension_numbers<[1], [0], [0], [1], [0, 0, 1, 1], [], []>} : vector<32x64xf32>, vector<64x64xf32>, vector<32x64xf32> -> vector<32x64xf32>
    %20 = vector.extract_strided_slice %2 {offsets = [0, 0], sizes = [32, 32], strides = [1, 1]} : vector<32x128xf32> to vector<32x32xf32>
    %cst_6 = arith.constant dense<0.000000e+00> : vector<32x64xf32>
    %21 = tpu.matmul %20, %19, %cst_6 {dimension_numbers = #tpu.dot_dimension_numbers<[1], [0], [0], [1], [0, 0, 1, 1], [], []>} : vector<32x32xf32>, vector<32x64xf32>, vector<32x64xf32> -> vector<32x64xf32>
    %22 = vector.extract_strided_slice %2 {offsets = [0, 99], sizes = [32, 1], strides = [1, 1]} : vector<32x128xf32> to vector<32x1xf32>
    %23 = vector.broadcast %22 : vector<32x1xf32> to vector<32x64xf32>
    %24 = arith.addf %21, %23 : vector<32x64xf32>
    %cst_7 = arith.constant 0.000000e+00 : f32
    %25 = vector.broadcast %cst_7 : f32 to vector<32x64xf32>
    %26 = arith.maximumf %24, %25 : vector<32x64xf32>
    %cst_8 = arith.constant dense<0.000000e+00> : vector<32x64xf32>
    %27 = tpu.matmul %26, %1, %cst_8 {dimension_numbers = #tpu.dot_dimension_numbers<[1], [0], [0], [1], [0, 0, 1, 1], [], []>} : vector<32x64xf32>, vector<64x64xf32>, vector<32x64xf32> -> vector<32x64xf32>
    %28 = vector.extract_strided_slice %2 {offsets = [0, 32], sizes = [32, 32], strides = [1, 1]} : vector<32x128xf32> to vector<32x32xf32>
    %cst_9 = arith.constant dense<0.000000e+00> : vector<32x64xf32>
    %29 = tpu.matmul %28, %27, %cst_9 {dimension_numbers = #tpu.dot_dimension_numbers<[1], [0], [0], [1], [0, 0, 1, 1], [], []>} : vector<32x32xf32>, vector<32x64xf32>, vector<32x64xf32> -> vector<32x64xf32>
    %30 = vector.extract_strided_slice %2 {offsets = [0, 100], sizes = [32, 1], strides = [1, 1]} : vector<32x128xf32> to vector<32x1xf32>
    %31 = vector.broadcast %30 : vector<32x1xf32> to vector<32x64xf32>
    %32 = arith.addf %29, %31 : vector<32x64xf32>
    %cst_10 = arith.constant 0.000000e+00 : f32
    %33 = vector.broadcast %cst_10 : f32 to vector<32x64xf32>
    %34 = arith.maximumf %32, %33 : vector<32x64xf32>
    %cst_11 = arith.constant dense<0.000000e+00> : vector<32x64xf32>
    %35 = tpu.matmul %34, %1, %cst_11 {dimension_numbers = #tpu.dot_dimension_numbers<[1], [0], [0], [1], [0, 0, 1, 1], [], []>} : vector<32x64xf32>, vector<64x64xf32>, vector<32x64xf32> -> vector<32x64xf32>
    %36 = vector.extract_strided_slice %2 {offsets = [0, 64], sizes = [32, 32], strides = [1, 1]} : vector<32x128xf32> to vector<32x32xf32>
    %cst_12 = arith.constant dense<0.000000e+00> : vector<32x64xf32>
    %37 = tpu.matmul %36, %35, %cst_12 {dimension_numbers = #tpu.dot_dimension_numbers<[1], [0], [0], [1], [0, 0, 1, 1], [], []>} : vector<32x32xf32>, vector<32x64xf32>, vector<32x64xf32> -> vector<32x64xf32>
    %38 = vector.extract_strided_slice %2 {offsets = [0, 101], sizes = [32, 1], strides = [1, 1]} : vector<32x128xf32> to vector<32x1xf32>
    %39 = vector.broadcast %38 : vector<32x1xf32> to vector<32x64xf32>
    %40 = arith.addf %37, %39 : vector<32x64xf32>
    %cst_13 = arith.constant 0.000000e+00 : f32
    %41 = vector.broadcast %cst_13 : f32 to vector<32x64xf32>
    %42 = arith.maximumf %40, %41 : vector<32x64xf32>
    %43 = vector.extract_strided_slice %2 {offsets = [0, 102], sizes = [32, 1], strides = [1, 1]} : vector<32x128xf32> to vector<32x1xf32>
    %44 = vector.broadcast %43 : vector<32x1xf32> to vector<32x64xf32>
    %45 = arith.mulf %42, %44 : vector<32x64xf32>
    %cst_14 = arith.constant dense<0.000000e+00> : vector<64xf32>
    %46 = vector.multi_reduction <add>, %45, %cst_14 [0] : vector<32x64xf32> to vector<64xf32>
    %47 = vector.shape_cast %46 : vector<64xf32> to vector<1x64xf32>
    %48 = vector.extract_strided_slice %2 {offsets = [0, 103], sizes = [1, 1], strides = [1, 1]} : vector<32x128xf32> to vector<1x1xf32>
    %49 = vector.broadcast %48 : vector<1x1xf32> to vector<1x64xf32>
    %50 = arith.addf %47, %49 : vector<1x64xf32>
    %c0_15 = arith.constant 0 : index
    %c0_16 = arith.constant 0 : index
    %51 = vector.load %arg3[%c0_15, %c0_16] : memref<1x64xf32, #tpu.memory_space<vmem>>, vector<1x64xf32>
    tpu.vector_store %arg3[%c0_15, %c0_16], %50 {strides = array<i32>} : memref<1x64xf32, #tpu.memory_space<vmem>>, vector<1x64xf32>,
    return
  }
}

</mosaic_0001>

<llo_original>
// kernel: net_forward_row.1
$region0: #{net_forward_row.1}
  #allocation0 [shape = 'u32[]', space=smem, size = 0x4, offset = 0x4, fixed_abs, tag = 'smem constant byte address 0x4 - core index']
  #allocation1 [shape = 'u32[72,128]{1,0:T(1,128)}', space=vmem, size = 0x9000, scoped, tag = 'internal scratch']
  %s0 = inlined_call_operand.hbm [shape: f32[2,64], index: 0, kind: input, shape index: {}]
  %s1 = inlined_call_operand.hbm [shape: f32[64,64], index: 1, kind: input, shape index: {}]
  %s2 = inlined_call_operand.hbm [shape: f32[32,128], index: 2, kind: input, shape index: {}]
  %s3 = inlined_call_operand.hbm [shape: f32[1,64], index: 3, kind: output, shape index: {}]
  %s4 = sld [smem:[#allocation0]]
  $region34: #{net_forward_row.1} parent=0
    _
  %s6 = ssub.s32 1, %s4
  %s7 = scalar_select 0, %s6, %s4
  $region1: #{net_forward_row.1} parent=0
    #allocation2 [shape = 'u8[1024]{0}', space=vmem, size = 0x400, scoped, tag = 'input window, operand 0, single buffered']
    #allocation3 [shape = 's32[1]{0}', space=sflag, size = 0x4, scoped, tag = 'scoped memory for net_forward_row.1']
    #allocation4 [shape = 's32[1]{0}', space=sflag, size = 0x4, scoped, tag = 'scoped memory for net_forward_row.1']
    #allocation5 [shape = 'u8[32768]{0}', space=vmem, size = 0x8000, scoped, tag = 'input window, operand 1, single buffered']
    #allocation6 [shape = 's32[1]{0}', space=sflag, size = 0x4, scoped, tag = 'scoped memory for net_forward_row.1']
    #allocation7 [shape = 'u8[16384]{0}', space=vmem, size = 0x4000, scoped, tag = 'input window, operand 2, single buffered']
    #allocation8 [shape = 'u8[512]{0}', space=vmem, size = 0x400, scoped, tag = 'output window, operand 0, single buffered']
    %8 = vsyncpa [#allocation3], 0
    %9 = vsyncpa [#allocation6], 0
    %10 = vsyncpa [#allocation4], 0
    // Predicated region
    $region2: #{net_forward_row.1} parent=1 // pred_check
      _
    $region3: #{net_forward_row.1} parent=1 // pred_check_branch
      %12 = sbr.rel (0) target = $region5
    $region4: #{net_forward_row.1} parent=1 // pred_region
      %14 = vsyncadd [#allocation3], 0
      %s16 = sshll.u32 %s0, 4
      %s17 = int_to_ptr.hbm [resolvable:$true] %s16
      %s18 = sshll.u32 [#allocation2], 4
      %s19 = int_to_ptr.vmem [resolvable:$true] %s18
      %21 = dma.hbm_to_vmem [thread:$0]  %s17, 32, %s19, [#allocation3]
    $region5: #{net_forward_row.1} parent=1 // pred_fallthru
      _
    // Predicated region
    $region6: #{net_forward_row.1} parent=1 // pred_check
      _
    $region7: #{net_forward_row.1} parent=1 // pred_check_branch
      %23 = sbr.rel (0) target = $region9
    $region8: #{net_forward_row.1} parent=1 // pred_region
      %25 = vsyncadd [#allocation6], 0
      %s26 = sshll.u32 %s1, 4
      %s27 = int_to_ptr.hbm [resolvable:$true] %s26
      %s28 = sshll.u32 [#allocation5], 4
      %s29 = int_to_ptr.vmem [resolvable:$true] %s28
      %34 = dma.hbm_to_vmem [thread:$0]  %s27, 1024, %s29, [#allocation6], 128, 128, 8
    $region9: #{net_forward_row.1} parent=1 // pred_fallthru
      _
    // Predicated region
    $region10: #{net_forward_row.1} parent=1 // pred_check
      _
    $region11: #{net_forward_row.1} parent=1 // pred_check_branch
      %36 = sbr.rel (0) target = $region13
    $region12: #{net_forward_row.1} parent=1 // pred_region
      %38 = vsyncadd [#allocation6], 0
      %s39 = sshll.u32 %s2, 4
      %s40 = int_to_ptr.hbm [resolvable:$true] %s39
      %s41 = sshll.u32 [#allocation7], 4
      %s42 = int_to_ptr.vmem [resolvable:$true] %s41
      %47 = dma.hbm_to_vmem [thread:$0]  %s40, 512, %s42, [#allocation6], 128, 128, 8
    $region13: #{net_forward_row.1} parent=1 // pred_fallthru
      _
    // Predicated region
    $region14: #{net_forward_row.1} parent=1 // pred_check
      _
    $region15: #{net_forward_row.1} parent=1 // pred_check_branch
      %49 = sbr.rel (0) target = $region17
    $region16: #{net_forward_row.1} parent=1 // pred_region
      %51 = dma.done [#allocation3], 32
    $region17: #{net_forward_row.1} parent=1 // pred_fallthru
      _
    // Predicated region
    $region18: #{net_forward_row.1} parent=1 // pred_check
      _
    $region19: #{net_forward_row.1} parent=1 // pred_check_branch
      %53 = sbr.rel (0) target = $region21
    $region20: #{net_forward_row.1} parent=1 // pred_region
      %55 = dma.done [#allocation6], 1024
    $region21: #{net_forward_row.1} parent=1 // pred_fallthru
      _
    // Predicated region
    $region22: #{net_forward_row.1} parent=1 // pred_check
      _
    $region23: #{net_forward_row.1} parent=1 // pred_check_branch
      %57 = sbr.rel (0) target = $region25
    $region24: #{net_forward_row.1} parent=1 // pred_region
      %59 = dma.done [#allocation6], 512
    $region25: #{net_forward_row.1} parent=1 // pred_fallthru
      _
    %v60 = vld [vmem:[#allocation2] sm:$0x3]
    %v61 = vld [vmem:[#allocation5] sm:$0xff]
    %v62 = vld [vmem:[#allocation5 + $0x8] sm:$0xff]
    %v63 = vld [vmem:[#allocation5 + $0x10] sm:$0xff]
    %v64 = vld [vmem:[#allocation5 + $0x18] sm:$0xff]
    %v65 = vld [vmem:[#allocation5 + $0x20] sm:$0xff]
    %v66 = vld [vmem:[#allocation5 + $0x28] sm:$0xff]
    %v67 = vld [vmem:[#allocation5 + $0x30] sm:$0xff]
    %v68 = vld [vmem:[#allocation5 + $0x38] sm:$0xff]
    %v69 = vld [vmem:[#allocation7] sm:$0xff]
    %v70 = vld [vmem:[#allocation7 + $0x8] sm:$0xff]
    %v71 = vld [vmem:[#allocation7 + $0x10] sm:$0xff]
    %v72 = vld [vmem:[#allocation7 + $0x18] sm:$0xff]
    %74 = vset.pattern.permute.xlu0 96
    %75 = vperm.xlu0 %74, %v69
    %v76 = vpop.permute.xlu0 %75
    %79 = vset.pattern.permute.xlu0 96
    %80 = vperm.xlu0 %79, %v70
    %v81 = vpop.permute.xlu0 %80
    %84 = vset.pattern.permute.xlu0 96
    %85 = vperm.xlu0 %84, %v71
    %v86 = vpop.permute.xlu0 %85
    %89 = vset.pattern.permute.xlu0 96
    %90 = vperm.xlu0 %89, %v72
    %v91 = vpop.permute.xlu0 %90
    %v93 = vperm.slane %v60, 0
    %v94 = vmul.f32 %v76, %v93
    %v95 = vmul.f32 %v81, %v93
    %v96 = vmul.f32 %v86, %v93
    %v97 = vmul.f32 %v91, %v93
    %98 = vset.pattern.permute.xlu0 97
    %99 = vperm.xlu0 %98, %v69
    %v100 = vpop.permute.xlu0 %99
    %102 = vset.pattern.permute.xlu0 97
    %103 = vperm.xlu0 %102, %v70
    %v104 = vpop.permute.xlu0 %103
    %106 = vset.pattern.permute.xlu0 97
    %107 = vperm.xlu0 %106, %v71
    %v108 = vpop.permute.xlu0 %107
    %110 = vset.pattern.permute.xlu0 97
    %111 = vperm.xlu0 %110, %v72
    %v112 = vpop.permute.xlu0 %111
    %v114 = vperm.slane %v60, 1
    %v115 = vmul.f32 %v100, %v114
    %v116 = vmul.f32 %v104, %v114
    %v117 = vmul.f32 %v108, %v114
    %v118 = vmul.f32 %v112, %v114
    %v119 = vadd.f32 %v94, %v115
    %v120 = vadd.f32 %v95, %v116
    %v121 = vadd.f32 %v96, %v117
    %v122 = vadd.f32 %v97, %v118
    %123 = vset.pattern.permute.xlu0 98
    %124 = vperm.xlu0 %123, %v69
    %v125 = vpop.permute.xlu0 %124
    %127 = vset.pattern.permute.xlu0 98
    %128 = vperm.xlu0 %127, %v70
    %v129 = vpop.permute.xlu0 %128
    %131 = vset.pattern.permute.xlu0 98
    %132 = vperm.xlu0 %131, %v71
    %v133 = vpop.permute.xlu0 %132
    %135 = vset.pattern.permute.xlu0 98
    %136 = vperm.xlu0 %135, %v72
    %v137 = vpop.permute.xlu0 %136
    %v139 = vadd.f32 %v119, %v125
    %v140 = vadd.f32 %v120, %v129
    %v141 = vadd.f32 %v121, %v133
    %v142 = vadd.f32 %v122, %v137
    %v143 = vmax.f32 %v139, 0.0
    %v144 = vmax.f32 %v140, 0.0
    %v145 = vmax.f32 %v141, 0.0
    %v146 = vmax.f32 %v142, 0.0
    %vm147 = vcmask 523264
    %v149 = vsel %vm147, %v143, 0
    %v152 = vsel %vm147, %v144, 0
    %v155 = vsel %vm147, %v145, 0
    %v158 = vsel %vm147, %v146, 0
    %160 = vmatpush.msra.mxu0 0.0
    %161 = vmatpush.msra.mxu0 0.0
    %162 = vmatpush.msra.mxu0 0.0
    %163 = vmatpush.msra.mxu0 0.0
    %164 = vmatpush.msra.mxu0 0.0
    %165 = vmatpush.msra.mxu0 0.0
    %166 = vmatpush.msra.mxu0 0.0
    %167 = vmatpush.msra.mxu0 0.0
    %168 = vmatpush.msra.mxu0 %v68
    %169 = vmatpush.msra.mxu0 %v67
    %170 = vmatpush.msra.mxu0 %v66
    %171 = vmatpush.msra.mxu0 %v65
    %172 = vmatpush.msra.mxu0 %v64
    %173 = vmatpush.msra.mxu0 %v63
    %174 = vmatpush.msra.mxu0 %v62
    %175 = vmatpush.msra.mxu0 %v61
    %176 = vmatmul.f32.gmra.mxu0 %v149
    %v177 = vpop.f32.mrf.mxu0
    %v178 = vadd.f32 0.0, %v177
    %179 = vmatmul.f32.gmra.mxu0 %v152
    %v180 = vpop.f32.mrf.mxu0
    %v181 = vadd.f32 0.0, %v180
    %182 = vmatmul.f32.gmra.mxu0 %v155
    %v183 = vpop.f32.mrf.mxu0
    %v184 = vadd.f32 0.0, %v183
    %185 = vmatmul.f32.gmra.mxu0 %v158
    %v186 = vpop.f32.mrf.mxu0
    %v187 = vadd.f32 0.0, %v186
    %188 = vdwg.mxu0
    %189 = vset.pattern.permute.xlu0 99
    %190 = vperm.xlu0 %189, %v69
    %v191 = vpop.permute.xlu0 %190
    %193 = vset.pattern.permute.xlu0 99
    %194 = vperm.xlu0 %193, %v70
    %v195 = vpop.permute.xlu0 %194
    %197 = vset.pattern.permute.xlu0 99
    %198 = vperm.xlu0 %197, %v71
    %v199 = vpop.permute.xlu0 %198
    %201 = vset.pattern.permute.xlu0 99
    %202 = vperm.xlu0 %201, %v72
    %v203 = vpop.permute.xlu0 %202
    %vm205 = vcmask 261120
    %v206 = vsel %vm205, %v69, 0
    %v208 = vsel %vm205, %v70, 0
    %v210 = vsel %vm205, %v71, 0
    %v212 = vsel %vm205, %v72, 0
    %214 = vmatpush.msra.mxu0 0.0
    %215 = vmatpush.msra.mxu0 0.0
    %216 = vmatpush.msra.mxu0 0.0
    %217 = vmatpush.msra.mxu0 0.0
    %218 = vmatpush.msra.mxu0 0.0
    %219 = vmatpush.msra.mxu0 0.0
    %220 = vmatpush.msra.mxu0 0.0
    %221 = vmatpush.msra.mxu0 0.0
    %222 = vmatpush.msra.mxu0 0.0
    %223 = vmatpush.msra.mxu0 0.0
    %224 = vmatpush.msra.mxu0 0.0
    %225 = vmatpush.msra.mxu0 0.0
    %226 = vmatpush.msra.mxu0 %v187
    %227 = vmatpush.msra.mxu0 %v184
    %228 = vmatpush.msra.mxu0 %v181
    %229 = vmatpush.msra.mxu0 %v178
    %230 = vmatmul.f32.gmra.mxu0 %v206
    %v231 = vpop.f32.mrf.mxu0
    %v232 = vadd.f32 %v191, %v231
    %233 = vmatmul.f32.gmra.mxu0 %v208
    %v234 = vpop.f32.mrf.mxu0
    %v235 = vadd.f32 %v195, %v234
    %236 = vmatmul.f32.gmra.mxu0 %v210
    %v237 = vpop.f32.mrf.mxu0
    %v238 = vadd.f32 %v199, %v237
    %239 = vmatmul.f32.gmra.mxu0 %v212
    %v240 = vpop.f32.mrf.mxu0
    %v241 = vadd.f32 %v203, %v240
    %242 = vdwg.mxu0
    %v243 = vmax.f32 %v232, 0.0
    %v244 = vmax.f32 %v235, 0.0
    %v245 = vmax.f32 %v238, 0.0
    %v246 = vmax.f32 %v241, 0.0
    %v248 = vsel %vm147, %v243, 0
    %v251 = vsel %vm147, %v244, 0
    %v254 = vsel %vm147, %v245, 0
    %v257 = vsel %vm147, %v246, 0
    %259 = vmatpush.msra.mxu0 0.0
    %260 = vmatpush.msra.mxu0 0.0
    %261 = vmatpush.msra.mxu0 0.0
    %262 = vmatpush.msra.mxu0 0.0
    %263 = vmatpush.msra.mxu0 0.0
    %264 = vmatpush.msra.mxu0 0.0
    %265 = vmatpush.msra.mxu0 0.0
    %266 = vmatpush.msra.mxu0 0.0
    %267 = vmatpush.msra.mxu0 %v68
    %268 = vmatpush.msra.mxu0 %v67
    %269 = vmatpush.msra.mxu0 %v66
    %270 = vmatpush.msra.mxu0 %v65
    %271 = vmatpush.msra.mxu0 %v64
    %272 = vmatpush.msra.mxu0 %v63
    %273 = vmatpush.msra.mxu0 %v62
    %274 = vmatpush.msra.mxu0 %v61
    %275 = vmatmul.f32.gmra.mxu0 %v248
    %v276 = vpop.f32.mrf.mxu0
    %v277 = vadd.f32 0.0, %v276
    %278 = vmatmul.f32.gmra.mxu0 %v251
    %v279 = vpop.f32.mrf.mxu0
    %v280 = vadd.f32 0.0, %v279
    %281 = vmatmul.f32.gmra.mxu0 %v254
    %v282 = vpop.f32.mrf.mxu0
    %v283 = vadd.f32 0.0, %v282
    %284 = vmatmul.f32.gmra.mxu0 %v257
    %v285 = vpop.f32.mrf.mxu0
    %v286 = vadd.f32 0.0, %v285
    %287 = vdwg.mxu0
    %288 = vset.pattern.permute.xlu0 100
    %289 = vperm.xlu0 %288, %v69
    %v290 = vpop.permute.xlu0 %289
    %292 = vset.pattern.permute.xlu0 100
    %293 = vperm.xlu0 %292, %v70
    %v294 = vpop.permute.xlu0 %293
    %296 = vset.pattern.permute.xlu0 100
    %297 = vperm.xlu0 %296, %v71
    %v298 = vpop.permute.xlu0 %297
    %300 = vset.pattern.permute.xlu0 100
    %301 = vperm.xlu0 %300, %v72
    %v302 = vpop.permute.xlu0 %301
    %304 = vrot.lane.b32.xlu0 %v69, 96
    %v305 = vpop.permute.xlu0 %304
    %306 = vrot.lane.b32.xlu0 %v70, 96
    %v307 = vpop.permute.xlu0 %306
    %308 = vrot.lane.b32.xlu0 %v71, 96
    %v309 = vpop.permute.xlu0 %308
    %310 = vrot.lane.b32.xlu0 %v72, 96
    %v311 = vpop.permute.xlu0 %310
    %v312 = vsel %vm205, %v305, 0
    %v314 = vsel %vm205, %v307, 0
    %v316 = vsel %vm205, %v309, 0
    %v318 = vsel %vm205, %v311, 0
    %320 = vmatpush.msra.mxu0 0.0
    %321 = vmatpush.msra.mxu0 0.0
    %322 = vmatpush.msra.mxu0 0.0
    %323 = vmatpush.msra.mxu0 0.0
    %324 = vmatpush.msra.mxu0 0.0
    %325 = vmatpush.msra.mxu0 0.0
    %326 = vmatpush.msra.mxu0 0.0
    %327 = vmatpush.msra.mxu0 0.0
    %328 = vmatpush.msra.mxu0 0.0
    %329 = vmatpush.msra.mxu0 0.0
    %330 = vmatpush.msra.mxu0 0.0
    %331 = vmatpush.msra.mxu0 0.0
    %332 = vmatpush.msra.mxu0 %v286
    %333 = vmatpush.msra.mxu0 %v283
    %334 = vmatpush.msra.mxu0 %v280
    %335 = vmatpush.msra.mxu0 %v277
    %336 = vmatmul.f32.gmra.mxu0 %v312
    %v337 = vpop.f32.mrf.mxu0
    %v338 = vadd.f32 %v290, %v337
    %339 = vmatmul.f32.gmra.mxu0 %v314
    %v340 = vpop.f32.mrf.mxu0
    %v341 = vadd.f32 %v294, %v340
    %342 = vmatmul.f32.gmra.mxu0 %v316
    %v343 = vpop.f32.mrf.mxu0
    %v344 = vadd.f32 %v298, %v343
    %345 = vmatmul.f32.gmra.mxu0 %v318
    %v346 = vpop.f32.mrf.mxu0
    %v347 = vadd.f32 %v302, %v346
    %348 = vdwg.mxu0
    %v349 = vmax.f32 %v338, 0.0
    %v350 = vmax.f32 %v341, 0.0
    %v351 = vmax.f32 %v344, 0.0
    %v352 = vmax.f32 %v347, 0.0
    %v354 = vsel %vm147, %v349, 0
    %v357 = vsel %vm147, %v350, 0
    %v360 = vsel %vm147, %v351, 0
    %v363 = vsel %vm147, %v352, 0
    %365 = vmatpush.msra.mxu0 0.0
    %366 = vmatpush.msra.mxu0 0.0
    %367 = vmatpush.msra.mxu0 0.0
    %368 = vmatpush.msra.mxu0 0.0
    %369 = vmatpush.msra.mxu0 0.0
    %370 = vmatpush.msra.mxu0 0.0
    %371 = vmatpush.msra.mxu0 0.0
    %372 = vmatpush.msra.mxu0 0.0
    %373 = vmatpush.msra.mxu0 %v68
    %374 = vmatpush.msra.mxu0 %v67
    %375 = vmatpush.msra.mxu0 %v66
    %376 = vmatpush.msra.mxu0 %v65
    %377 = vmatpush.msra.mxu0 %v64
    %378 = vmatpush.msra.mxu0 %v63
    %379 = vmatpush.msra.mxu0 %v62
    %380 = vmatpush.msra.mxu0 %v61
    %381 = vmatmul.f32.gmra.mxu0 %v354
    %v382 = vpop.f32.mrf.mxu0
    %v383 = vadd.f32 0.0, %v382
    %384 = vmatmul.f32.gmra.mxu0 %v357
    %v385 = vpop.f32.mrf.mxu0
    %v386 = vadd.f32 0.0, %v385
    %387 = vmatmul.f32.gmra.mxu0 %v360
    %v388 = vpop.f32.mrf.mxu0
    %v389 = vadd.f32 0.0, %v388
    %390 = vmatmul.f32.gmra.mxu0 %v363
    %v391 = vpop.f32.mrf.mxu0
    %v392 = vadd.f32 0.0, %v391
    %393 = vdwg.mxu0
    %394 = vset.pattern.permute.xlu0 101
    %395 = vperm.xlu0 %394, %v69
    %v396 = vpop.permute.xlu0 %395
    %398 = vset.pattern.permute.xlu0 101
    %399 = vperm.xlu0 %398, %v70
    %v400 = vpop.permute.xlu0 %399
    %402 = vset.pattern.permute.xlu0 101
    %403 = vperm.xlu0 %402, %v71
    %v404 = vpop.permute.xlu0 %403
    %406 = vset.pattern.permute.xlu0 101
    %407 = vperm.xlu0 %406, %v72
    %v408 = vpop.permute.xlu0 %407
    %410 = vrot.lane.b32.xlu0 %v69, 64
    %v411 = vpop.permute.xlu0 %410
    %412 = vrot.lane.b32.xlu0 %v70, 64
    %v413 = vpop.permute.xlu0 %412
    %414 = vrot.lane.b32.xlu0 %v71, 64
    %v415 = vpop.permute.xlu0 %414
    %416 = vrot.lane.b32.xlu0 %v72, 64
    %v417 = vpop.permute.xlu0 %416
    %v418 = vsel %vm205, %v411, 0
    %v420 = vsel %vm205, %v413, 0
    %v422 = vsel %vm205, %v415, 0
    %v424 = vsel %vm205, %v417, 0
    %426 = vmatpush.msra.mxu0 0.0
    %427 = vmatpush.msra.mxu0 0.0
    %428 = vmatpush.msra.mxu0 0.0
    %429 = vmatpush.msra.mxu0 0.0
    %430 = vmatpush.msra.mxu0 0.0
    %431 = vmatpush.msra.mxu0 0.0
    %432 = vmatpush.msra.mxu0 0.0
    %433 = vmatpush.msra.mxu0 0.0
    %434 = vmatpush.msra.mxu0 0.0
    %435 = vmatpush.msra.mxu0 0.0
    %436 = vmatpush.msra.mxu0 0.0
    %437 = vmatpush.msra.mxu0 0.0
    %438 = vmatpush.msra.mxu0 %v392
    %439 = vmatpush.msra.mxu0 %v389
    %440 = vmatpush.msra.mxu0 %v386
    %441 = vmatpush.msra.mxu0 %v383
    %442 = vmatmul.f32.gmra.mxu0 %v418
    %v443 = vpop.f32.mrf.mxu0
    %v444 = vadd.f32 %v396, %v443
    %445 = vmatmul.f32.gmra.mxu0 %v420
    %v446 = vpop.f32.mrf.mxu0
    %v447 = vadd.f32 %v400, %v446
    %448 = vmatmul.f32.gmra.mxu0 %v422
    %v449 = vpop.f32.mrf.mxu0
    %v450 = vadd.f32 %v404, %v449
    %451 = vmatmul.f32.gmra.mxu0 %v424
    %v452 = vpop.f32.mrf.mxu0
    %v453 = vadd.f32 %v408, %v452
    %454 = vdwg.mxu0
    %v455 = vmax.f32 %v444, 0.0
    %v456 = vmax.f32 %v447, 0.0
    %v457 = vmax.f32 %v450, 0.0
    %v458 = vmax.f32 %v453, 0.0
    %459 = vset.pattern.permute.xlu0 102
    %460 = vperm.xlu0 %459, %v69
    %v461 = vpop.permute.xlu0 %460
    %463 = vset.pattern.permute.xlu0 102
    %464 = vperm.xlu0 %463, %v70
    %v465 = vpop.permute.xlu0 %464
    %467 = vset.pattern.permute.xlu0 102
    %468 = vperm.xlu0 %467, %v71
    %v469 = vpop.permute.xlu0 %468
    %471 = vset.pattern.permute.xlu0 102
    %472 = vperm.xlu0 %471, %v72
    %v473 = vpop.permute.xlu0 %472
    %v475 = vmul.f32 %v455, %v461
    %v476 = vmul.f32 %v456, %v465
    %v477 = vmul.f32 %v457, %v469
    %v478 = vmul.f32 %v458, %v473
    %v479 = vsel %vm147, %v475, 0.0
    %v480 = vsel %vm147, %v476, 0.0
    %v481 = vadd.f32 %v479, %v480
    %v482 = vsel %vm147, %v477, 0.0
    %v483 = vadd.f32 %v481, %v482
    %v484 = vsel %vm147, %v478, 0.0
    %v485 = vadd.f32 %v483, %v484
    %v486 = vrot.slane %v485, 4
    %v487 = vadd.f32 %v485, %v486
    %v488 = vrot.slane %v487, 2
    %v489 = vadd.f32 %v487, %v488
    %v490 = vrot.slane %v489, 1
    %v491 = vadd.f32 %v489, %v490
    %492 = vset.pattern.permute.xlu0 103
    %493 = vperm.xlu0 %492, %v69
    %v494 = vpop.permute.xlu0 %493
    %v496 = vadd.f32 %v491, %v494
    %vm497 = vcmask 516096
    %498 = vst.msk [vmem:[#allocation8] sm:$0x1] %vm497, %v496
    // Predicated region
    $region26: #{net_forward_row.1} parent=1 // pred_check
      _
    $region27: #{net_forward_row.1} parent=1 // pred_check_branch
      %500 = sbr.rel (0) target = $region29
    $region28: #{net_forward_row.1} parent=1 // pred_region
      %502 = vsyncadd [#allocation4], 0
      %s504 = sshll.u32 [#allocation8], 4
      %s505 = int_to_ptr.vmem [resolvable:$true] %s504
      %s506 = sshll.u32 %s3, 4
      %s507 = int_to_ptr.hbm [resolvable:$true] %s506
      %509 = dma.vmem_to_hbm [thread:$0]  %s505, 16, %s507, [#allocation4]
    $region29: #{net_forward_row.1} parent=1 // pred_fallthru
      _
    // Predicated region
    $region30: #{net_forward_row.1} parent=1 // pred_check
      _
    $region31: #{net_forward_row.1} parent=1 // pred_check_branch
      %511 = sbr.rel (0) target = $region33
    $region32: #{net_forward_row.1} parent=1 // pred_region
      %513 = dma.done [#allocation4], 16
    $region33: #{net_forward_row.1} parent=1 // pred_fallthru
      _
    %514 = vsyncpa [#allocation3], 1
    %515 = vsyncpa [#allocation6], 1
    %516 = vsyncpa [#allocation4], 1

</llo_original>
